<compile_context>
chip_gen: v7x
topology: tpu7x:2x2x1
jax: 0.10.0
libtpu: 0.0.40
codegen_flags: <defaults>
</compile_context>

<pallas_src>
import jax
import jax.numpy as jnp
from jax.experimental import pallas as pl
from jax.experimental.pallas import tpu as pltpu

_MIB = 1024 * 1024


# ---------------------------------------------------------------------------
# Tiling / budgeting helpers (generation-aware)
# ---------------------------------------------------------------------------
def _detect_vmem_capacity_bytes():
    """Per-core VMEM capacity; conservative (v7x, 64 MiB) fallback if unknown."""
    try:
        info = pltpu.get_tpu_info()
        cap = int(getattr(info, "vmem_capacity_bytes", 0))
        if cap > 0:
            return cap
    except Exception:
        pass
    return 64 * _MIB


def _pick_n_tile(n_padded, max_tile):
    """Largest lane-dense tile (multiple of 128) <= max_tile dividing n_padded."""
    for t in (1024, 512, 256, 128):
        if t <= max_tile and n_padded % t == 0:
            return t
    return n_padded  # unreachable once N is padded to a multiple of 128


def _pick_s_chunk(s):
    """Chunk size for streaming the sampled-point axis."""
    if s <= 256:
        return s
    for c in (256, 128):
        if s % c == 0:
            return c
    return s  # awkward S: fall back to a single chunk


# ---------------------------------------------------------------------------
# Fused kernel: streamed 3-NN interpolation + (implicit concat) + MLP chain.
# ---------------------------------------------------------------------------
def _make_fused_kernel(num_layers, has_points1, k_neighbors, s_total, s_chunk, mm_dtype):
    num_chunks = s_total // s_chunk
    assert num_chunks * s_chunk == s_total

    def kernel(*refs):
        out_ref = refs[-1]
        it = iter(refs[:-1])
        xyz1 = next(it)[0].astype(jnp.float32)       # (3, TN)   query coordinates (f32)
        xyz2_ref = next(it)                          # (1, S, 3) sampled coordinates (f32)
        pts2_ref = next(it)                          # (1, D2, S) sampled features (mm_dtype)
        p1_ref = next(it) if has_points1 else None   # (1, D1, TN) skip features (mm_dtype)
        wb = list(it)                                # folded weights / biases

        TN = xyz1.shape[1]
        D2 = pts2_ref.shape[1]
        k = k_neighbors

        # ---- phase 1: streamed top-k over S chunks; only (SC, TN) temporaries ----
        d_run = [jnp.full((1, TN), jnp.inf, jnp.float32) for _ in range(k)]
        i_run = [jnp.zeros((1, TN), jnp.int32) for _ in range(k)]
        for c in range(num_chunks):
            base = c * s_chunk
            x2c = xyz2_ref[0, base:base + s_chunk, :].astype(jnp.float32)    # (SC, 3)
            # direct (x1 - x2)^2 form: VPU only, non-negative by construction
            dc = jnp.zeros((s_chunk, TN), jnp.float32)
            for dim in range(3):
                diff = x2c[:, dim:dim + 1] - xyz1[dim:dim + 1, :]
                dc = dc + diff * diff
            rowc = jax.lax.broadcasted_iota(jnp.int32, (s_chunk, TN), 0) + base
            for _ in range(k):
                dmin = jnp.min(dc, axis=0, keepdims=True)                    # (1, TN)
                imin = jnp.min(jnp.where(dc == dmin, rowc, s_total),
                               axis=0, keepdims=True)                        # lowest row among ties
                dc = jnp.where(rowc == imin, jnp.inf, dc)                    # retire selected entry
                # sorted insertion of (dmin, imin) into the running top-k
                lt = [dmin < d_run[j] for j in range(k)]
                nd = [jnp.where(lt[0], dmin, d_run[0])]
                ni = [jnp.where(lt[0], imin, i_run[0])]
                for j in range(1, k):
                    nd.append(jnp.where(lt[j - 1], d_run[j - 1],
                                        jnp.where(lt[j], dmin, d_run[j])))
                    ni.append(jnp.where(lt[j - 1], i_run[j - 1],
                                        jnp.where(lt[j], imin, i_run[j])))
                d_run, i_run = nd, ni

        # ---- inverse-distance weights: normalize in f32 BEFORE the bf16 cast ----
        recips = [pl.reciprocal(d_run[j] + 1e-8, approx=True) for j in range(k)]   # EUP
        norm = recips[0]
        for j in range(1, k):
            norm = norm + recips[j]
        inv_norm = pl.reciprocal(norm, approx=True)
        weights = [r * inv_norm for r in recips]                             # (1, TN), in [0, 1]

        # ---- phase 2: chunked sparse gather == bf16 MXU matmuls, f32 accumulation ----
        interp = jnp.zeros((D2, TN), jnp.float32)
        for c in range(num_chunks):
            base = c * s_chunk
            rowc = jax.lax.broadcasted_iota(jnp.int32, (s_chunk, TN), 0) + base
            wchunk = jnp.zeros((s_chunk, TN), jnp.float32)
            for j in range(k):
                wchunk = wchunk + jnp.where(rowc == i_run[j], weights[j], 0.0)
            pts2_chunk = pts2_ref[0, :, base:base + s_chunk]                 # (D2, SC) mm_dtype
            interp = interp + jnp.dot(pts2_chunk, wchunk.astype(mm_dtype),
                                      preferred_element_type=jnp.float32)

        # ---- MLP chain (folded Conv1d + BN, ReLU); bf16 MXU, f32 accumulate ----
        if has_points1:
            w0a, w0b, b0 = wb[0], wb[1], wb[2]
            p1 = p1_ref[0]                                                   # (D1, TN) mm_dtype
            h = (jnp.dot(w0a[...], p1, preferred_element_type=jnp.float32)
                 + jnp.dot(w0b[...], interp.astype(mm_dtype),
                           preferred_element_type=jnp.float32)
                 + b0[...])
            rest = wb[3:]
        else:
            w0, b0 = wb[0], wb[1]
            h = (jnp.dot(w0[...], interp.astype(mm_dtype),
                         preferred_element_type=jnp.float32) + b0[...])
            rest = wb[2:]
        h = jnp.maximum(h, 0.0)
        for li in range(num_layers - 1):
            wl, bl = rest[2 * li], rest[2 * li + 1]
            h = jnp.dot(wl[...], h.astype(mm_dtype),
                        preferred_element_type=jnp.float32) + bl[...]
            h = jnp.maximum(h, 0.0)

        out_ref[0] = h.astype(out_ref.dtype)                                 # (Cout, TN)

    return kernel


# ---------------------------------------------------------------------------
# Module wrapper (PyTorch-style channel-first interface)
# ---------------------------------------------------------------------------
class PointNetFeaturePropagation:
    def __init__(self, in_channel, mlp, key, mm_dtype=jnp.bfloat16, out_dtype=jnp.float32):
        # out_dtype=jnp.bfloat16 halves HBM writeback if downstream layers accept it.
        self.in_channel = in_channel
        self.mlp = list(mlp)
        self.mm_dtype = mm_dtype
        self.out_dtype = out_dtype
        self.folded = []  # per layer: (W_folded [Cout, Cin] f32, bias_folded [Cout] f32)
        eps = 1e-5
        last = in_channel
        for out_ch in mlp:
            key, k1, k2, k3, k4, k5, k6 = jax.random.split(key, 7)
            wt = 0.1 * jax.random.normal(k1, (out_ch, last), jnp.float32)   # Conv1d [Cout, Cin, 1]
            b = 0.1 * jax.random.normal(k2, (out_ch,), jnp.float32)
            gamma = 1.0 + 0.1 * jax.random.normal(k3, (out_ch,), jnp.float32)
            beta = 0.1 * jax.random.normal(k4, (out_ch,), jnp.float32)
            rmean = 0.1 * jax.random.normal(k5, (out_ch,), jnp.float32)
            rvar = jax.random.uniform(k6, (out_ch,), jnp.float32, 0.5, 1.5)
            scale = gamma / jnp.sqrt(rvar + eps)                             # (Cout,)
            self.folded.append((wt * scale[:, None], (b - rmean) * scale + beta))
            last = out_ch

    def _vmem_limit_bytes(self, cap, TN, S, SC, D1, D2, k):
        f32 = 4
        mmb = jnp.dtype(self.mm_dtype).itemsize
        outb = jnp.dtype(self.out_dtype).itemsize
        c_last, c_max = self.mlp[-1], max(self.mlp)
        # streamed, double-buffered per-tile blocks (xyz1, points1, output)
        est = 2 * (3 * TN * f32 + D1 * TN * mmb + c_last * TN * outb)
        # resident blocks (constant index maps; still double-buffered by default)
        w_bytes = sum(w.size * mmb + b.size * f32 for w, b in self.folded)
        est += 2 * (S * 3 * f32 + D2 * S * mmb + w_bytes)
        # in-kernel temporaries: distance / one-hot chunks, interp, activations, top-k carries
        est += 3 * SC * TN * f32 + D2 * TN * f32 + 2 * c_max * TN * f32 + 8 * k * TN * f32
        est = int(est * 1.5) + 4 * _MIB
        return min(max(est, 32 * _MIB), cap * 3 // 4)

    def __call__(self, xyz1, xyz2, points1, points2):
        """xyz1 [B,3,N], xyz2 [B,3,S], points1 [B,D1,N] or None, points2 [B,D2,S]
        -> new_points [B, mlp[-1], N]"""
        B, _, N = xyz1.shape
        S = xyz2.shape[2]
        D2 = points2.shape[1]
        has_p1 = points1 is not None
        D1 = points1.shape[1] if has_p1 else 0
        k_neighbors = min(3, S)      # S == 1 handled by the same path (== repeat)
        c_last = self.mlp[-1]
        num_layers = len(self.mlp)
        mm = self.mm_dtype

        # pad the point axis to a multiple of 128 -> lane-dense tiles & stores
        n_pad = max(128, -(-N // 128) * 128)
        if n_pad != N:
            xyz1 = jnp.pad(xyz1, ((0, 0), (0, 0), (0, n_pad - N)))
            if has_p1:
                points1 = jnp.pad(points1, ((0, 0), (0, 0), (0, n_pad - N)))

        # generation-aware tile size and VMEM budget
        cap = _detect_vmem_capacity_bytes()
        max_tn = 1024 if cap >= 96 * _MIB else 512       # TN <= 512 on v7x (64 MiB VMEM)
        TN = _pick_n_tile(n_pad, max_tn)
        SC = _pick_s_chunk(S)
        vmem_limit = self._vmem_limit_bytes(cap, TN, S, SC, D1, D2, k_neighbors)

        # pre-cast the big feature operands to the matmul dtype (halves HBM traffic);
        # coordinates stay f32 so neighbour selection matches the reference.
        points2_c = points2.astype(mm)
        points1_c = points1.astype(mm) if has_p1 else None
        xyz2_t = jnp.transpose(xyz2, (0, 2, 1))          # (B, S, 3)

        inputs = [xyz1, xyz2_t, points2_c]
        in_specs = [
            pl.BlockSpec((1, 3, TN), lambda b, n: (b, 0, n)),
            pl.BlockSpec((1, S, 3), lambda b, n: (b, 0, 0)),
            pl.BlockSpec((1, D2, S), lambda b, n: (b, 0, 0)),
        ]
        if has_p1:
            inputs.append(points1_c)
            in_specs.append(pl.BlockSpec((1, D1, TN), lambda b, n: (b, 0, n)))

        def add_param(arr):
            inputs.append(arr)
            in_specs.append(pl.BlockSpec(arr.shape, lambda b, n: (0, 0)))

        w0, b0 = self.folded[0]
        if has_p1:
            # split layer-0 weight so concat([points1, interp]) never materializes
            add_param(w0[:, :D1].astype(mm))
            add_param(w0[:, D1:].astype(mm))
        else:
            add_param(w0.astype(mm))
        add_param(b0[:, None])
        for wl, bl in self.folded[1:]:
            add_param(wl.astype(mm))
            add_param(bl[:, None])

        kernel = _make_fused_kernel(num_layers, has_p1, k_neighbors, S, SC, mm)
        out = pl.pallas_call(
            kernel,
            out_shape=jax.ShapeDtypeStruct((B, c_last, n_pad), self.out_dtype),
            grid=(B, n_pad // TN),
            in_specs=in_specs,
            out_specs=pl.BlockSpec((1, c_last, TN), lambda b, n: (b, 0, n)),
            compiler_params=pltpu.CompilerParams(
                dimension_semantics=("parallel", "parallel"),
                vmem_limit_bytes=vmem_limit,
            ),
        )(*inputs)
        return out[:, :, :N] if n_pad != N else out


# ---------------------------------------------------------------------------
# Pure-JAX f32 reference (same folded BN parameters) for a correctness check
# ---------------------------------------------------------------------------
def _reference(xyz1, xyz2, points1, points2, folded):
    xyz1_t = jnp.transpose(xyz1, (0, 2, 1))          # (B, N, 3)
    xyz2_t = jnp.transpose(xyz2, (0, 2, 1))          # (B, S, 3)
    pts2_t = jnp.transpose(points2, (0, 2, 1))       # (B, S, D2)
    B, N, _ = xyz1_t.shape
    S = xyz2_t.shape[1]
    if S == 1:
        interp = jnp.repeat(pts2_t, N, axis=1)
    else:
        diff = xyz1_t[:, :, None, :] - xyz2_t[:, None, :, :]
        d = jnp.sum(diff * diff, axis=-1)            # (B, N, S), direct formula
        k = min(3, S)
        idx = jnp.argsort(d, axis=-1)[:, :, :k]
        dists = jnp.take_along_axis(d, idx, axis=-1)
        recip = 1.0 / (dists + 1e-8)
        weight = recip / jnp.sum(recip, axis=-1, keepdims=True)
        gathered = jax.vmap(lambda p, i: p[i])(pts2_t, idx)     # (B, N, k, D2)
        interp = jnp.sum(gathered * weight[..., None], axis=2)
    if points1 is not None:
        x = jnp.concatenate([jnp.transpose(points1, (0, 2, 1)), interp], axis=-1)
    else:
        x = interp
    for wl, bl in folded:                             # wl (Cout, Cin), bl (Cout,)
        x = jnp.maximum(jnp.einsum("bnc,oc->bno", x, wl) + bl, 0.0)
    return jnp.transpose(x, (0, 2, 1))


if __name__ == "__main__":
    # --- case 1: with skip features (points1); small S -> single S-chunk path ----
    k_xyz1, k_xyz2, k_p1, k_p2, k_params = jax.random.split(jax.random.PRNGKey(0), 5)
    B, N, S, D1, D2 = 2, 16, 8, 4, 6
    mlp = [32, 16]
    xyz1 = jax.random.normal(k_xyz1, (B, 3, N), jnp.float32)
    xyz2 = jax.random.normal(k_xyz2, (B, 3, S), jnp.float32)
    points1 = jax.random.normal(k_p1, (B, D1, N), jnp.float32)
    points2 = jax.random.normal(k_p2, (B, D2, S), jnp.float32)
    module = PointNetFeaturePropagation(in_channel=D1 + D2, mlp=mlp, key=k_params)
    out = jax.block_until_ready(module(xyz1, xyz2, points1, points2))
    ref = _reference(xyz1, xyz2, points1, points2, module.folded)
    assert out.shape == (B, mlp[-1], N), out.shape
    err1 = float(jnp.max(jnp.abs(out - ref)))
    # bf16 feature path + approx EUP reciprocals -> relaxed tolerance vs f32 reference
    assert jnp.allclose(out, ref, rtol=3e-2, atol=3e-2), err1

    # --- case 2: no points1; larger S exercises the streamed multi-chunk top-3 and N padding ---
    k_xyz1b, k_xyz2b, k_p2b, k_pb = jax.random.split(jax.random.PRNGKey(1), 4)
    B2, N2, S2, D2b = 1, 200, 512, 8
    mlp2 = [16, 8]
    xyz1b = jax.random.normal(k_xyz1b, (B2, 3, N2), jnp.float32)
    xyz2b = jax.random.normal(k_xyz2b, (B2, 3, S2), jnp.float32)
    points2b = jax.random.normal(k_p2b, (B2, D2b, S2), jnp.float32)
    module2 = PointNetFeaturePropagation(in_channel=D2b, mlp=mlp2, key=k_pb)
    out2 = jax.block_until_ready(module2(xyz1b, xyz2b, None, points2b))
    ref2 = _reference(xyz1b, xyz2b, None, points2b, module2.folded)
    assert out2.shape == (B2, mlp2[-1], N2), out2.shape
    err2 = float(jnp.max(jnp.abs(out2 - ref2)))
    assert jnp.allclose(out2, ref2, rtol=3e-2, atol=3e-2), err2

    print("KERNEL_OK")
</pallas_src>

<mosaic_0001>
module attributes {stable_mosaic.version = 11 : i64} {
  func.func @kernel(%arg0: i32, %arg1: i32, %arg2: memref<1x3x128xf32, #tpu.memory_space<vmem>>, %arg3: memref<1x8x3xf32, #tpu.memory_space<vmem>>, %arg4: memref<1x6x8xbf16, #tpu.memory_space<vmem>>, %arg5: memref<1x4x128xbf16, #tpu.memory_space<vmem>>, %arg6: memref<32x4xbf16, #tpu.memory_space<vmem>>, %arg7: memref<32x6xbf16, #tpu.memory_space<vmem>>, %arg8: memref<32x1xf32, #tpu.memory_space<vmem>>, %arg9: memref<16x32xbf16, #tpu.memory_space<vmem>>, %arg10: memref<16x1xf32, #tpu.memory_space<vmem>>, %arg11: memref<1x16x128xf32, #tpu.memory_space<vmem>>) attributes {dimension_semantics = [#tpu.dimension_semantics<parallel>, #tpu.dimension_semantics<parallel>], iteration_bounds = array<i64: 2, 1>, scalar_prefetch = 0 : i64, scratch_operands = 0 : i64, tpu.core_type = #tpu.core_type<tc>, window_params = [{transform_indices = @transform_0, window_bounds = array<i64: 1, 3, 128>}, {transform_indices = @transform_1, window_bounds = array<i64: 1, 8, 3>}, {transform_indices = @transform_2, window_bounds = array<i64: 1, 6, 8>}, {transform_indices = @transform_3, window_bounds = array<i64: 1, 4, 128>}, {pipeline_mode = #tpu.pipeline_mode<synchronous>, transform_indices = @transform_4, window_bounds = array<i64: 32, 4>}, {pipeline_mode = #tpu.pipeline_mode<synchronous>, transform_indices = @transform_5, window_bounds = array<i64: 32, 6>}, {pipeline_mode = #tpu.pipeline_mode<synchronous>, transform_indices = @transform_6, window_bounds = array<i64: 32, 1>}, {pipeline_mode = #tpu.pipeline_mode<synchronous>, transform_indices = @transform_7, window_bounds = array<i64: 16, 32>}, {pipeline_mode = #tpu.pipeline_mode<synchronous>, transform_indices = @transform_8, window_bounds = array<i64: 16, 1>}, {transform_indices = @transform_9, window_bounds = array<i64: 1, 16, 128>}]} {
    %c0 = arith.constant 0 : index
    %c0_0 = arith.constant 0 : index
    %c0_1 = arith.constant 0 : index
    %0 = vector.load %arg2[%c0, %c0_0, %c0_1] : memref<1x3x128xf32, #tpu.memory_space<vmem>>, vector<1x3x128xf32>
    %1 = vector.shape_cast %0 : vector<1x3x128xf32> to vector<3x128xf32>
    %cst = arith.constant 0x7F800000 : f32
    %2 = vector.broadcast %cst : f32 to vector<1x128xf32>
    %cst_2 = arith.constant 0x7F800000 : f32
    %3 = vector.broadcast %cst_2 : f32 to vector<1x128xf32>
    %cst_3 = arith.constant 0x7F800000 : f32
    %4 = vector.broadcast %cst_3 : f32 to vector<1x128xf32>
    %c0_i32 = arith.constant 0 : i32
    %5 = vector.broadcast %c0_i32 : i32 to vector<1x128xi32>
    %c0_i32_4 = arith.constant 0 : i32
    %6 = vector.broadcast %c0_i32_4 : i32 to vector<1x128xi32>
    %c0_i32_5 = arith.constant 0 : i32
    %7 = vector.broadcast %c0_i32_5 : i32 to vector<1x128xi32>
    %c0_6 = arith.constant 0 : index
    %c0_7 = arith.constant 0 : index
    %c0_8 = arith.constant 0 : index
    %8 = vector.load %arg3[%c0_6, %c0_7, %c0_8] : memref<1x8x3xf32, #tpu.memory_space<vmem>>, vector<1x8x3xf32>
    %9 = vector.shape_cast %8 : vector<1x8x3xf32> to vector<8x3xf32>
    %cst_9 = arith.constant 0.000000e+00 : f32
    %10 = vector.broadcast %cst_9 : f32 to vector<8x128xf32>
    %11 = vector.extract_strided_slice %9 {offsets = [0, 0], sizes = [8, 1], strides = [1, 1]} : vector<8x3xf32> to vector<8x1xf32>
    %12 = vector.extract_strided_slice %1 {offsets = [0, 0], sizes = [1, 128], strides = [1, 1]} : vector<3x128xf32> to vector<1x128xf32>
    %13 = vector.broadcast %11 : vector<8x1xf32> to vector<8x128xf32>
    %14 = vector.broadcast %12 : vector<1x128xf32> to vector<8x128xf32>
    %15 = arith.subf %13, %14 : vector<8x128xf32>
    %16 = arith.mulf %15, %15 : vector<8x128xf32>
    %17 = arith.addf %10, %16 : vector<8x128xf32>
    %18 = vector.extract_strided_slice %9 {offsets = [0, 1], sizes = [8, 1], strides = [1, 1]} : vector<8x3xf32> to vector<8x1xf32>
    %19 = vector.extract_strided_slice %1 {offsets = [1, 0], sizes = [1, 128], strides = [1, 1]} : vector<3x128xf32> to vector<1x128xf32>
    %20 = vector.broadcast %18 : vector<8x1xf32> to vector<8x128xf32>
    %21 = vector.broadcast %19 : vector<1x128xf32> to vector<8x128xf32>
    %22 = arith.subf %20, %21 : vector<8x128xf32>
    %23 = arith.mulf %22, %22 : vector<8x128xf32>
    %24 = arith.addf %17, %23 : vector<8x128xf32>
    %25 = vector.extract_strided_slice %9 {offsets = [0, 2], sizes = [8, 1], strides = [1, 1]} : vector<8x3xf32> to vector<8x1xf32>
    %26 = vector.extract_strided_slice %1 {offsets = [2, 0], sizes = [1, 128], strides = [1, 1]} : vector<3x128xf32> to vector<1x128xf32>
    %27 = vector.broadcast %25 : vector<8x1xf32> to vector<8x128xf32>
    %28 = vector.broadcast %26 : vector<1x128xf32> to vector<8x128xf32>
    %29 = arith.subf %27, %28 : vector<8x128xf32>
    %30 = arith.mulf %29, %29 : vector<8x128xf32>
    %31 = arith.addf %24, %30 : vector<8x128xf32>
    %32 = tpu.iota {dimensions = array<i32: 0>} : vector<8x128xi32>
    %c0_i32_10 = arith.constant 0 : i32
    %33 = vector.broadcast %c0_i32_10 : i32 to vector<8x128xi32>
    %34 = arith.addi %32, %33 : vector<8x128xi32>
    %cst_11 = arith.constant dense<0x7F800000> : vector<128xf32>
    %35 = vector.multi_reduction <minimumf>, %31, %cst_11 [0] : vector<8x128xf32> to vector<128xf32>
    %36 = vector.shape_cast %35 : vector<128xf32> to vector<1x128xf32>
    %37 = vector.broadcast %36 : vector<1x128xf32> to vector<8x128xf32>
    %38 = arith.cmpf oeq, %31, %37 : vector<8x128xf32>
    %c8_i32 = arith.constant 8 : i32
    %39 = vector.broadcast %c8_i32 : i32 to vector<8x128xi32>
    %40 = arith.select %38, %34, %39 : vector<8x128xi1>, vector<8x128xi32>
    %cst_12 = arith.constant dense<2147483647> : vector<128xi32>
    %41 = vector.multi_reduction <minsi>, %40, %cst_12 [0] : vector<8x128xi32> to vector<128xi32>
    %42 = vector.shape_cast %41 : vector<128xi32> to vector<1x128xi32>
    %43 = vector.broadcast %42 : vector<1x128xi32> to vector<8x128xi32>
    %44 = arith.cmpi eq, %34, %43 : vector<8x128xi32>
    %cst_13 = arith.constant 0x7F800000 : f32
    %45 = vector.broadcast %cst_13 : f32 to vector<8x128xf32>
    %46 = arith.select %44, %45, %31 : vector<8x128xi1>, vector<8x128xf32>
    %47 = arith.cmpf olt, %36, %2 : vector<1x128xf32>
    %48 = arith.cmpf olt, %36, %3 : vector<1x128xf32>
    %49 = arith.cmpf olt, %36, %4 : vector<1x128xf32>
    %50 = arith.select %47, %36, %2 : vector<1x128xi1>, vector<1x128xf32>
    %51 = arith.select %47, %42, %5 : vector<1x128xi1>, vector<1x128xi32>
    %52 = arith.select %48, %36, %3 : vector<1x128xi1>, vector<1x128xf32>
    %53 = arith.select %47, %2, %52 : vector<1x128xi1>, vector<1x128xf32>
    %54 = arith.select %48, %42, %6 : vector<1x128xi1>, vector<1x128xi32>
    %55 = arith.select %47, %5, %54 : vector<1x128xi1>, vector<1x128xi32>
    %56 = arith.select %49, %36, %4 : vector<1x128xi1>, vector<1x128xf32>
    %57 = arith.select %48, %3, %56 : vector<1x128xi1>, vector<1x128xf32>
    %58 = arith.select %49, %42, %7 : vector<1x128xi1>, vector<1x128xi32>
    %59 = arith.select %48, %6, %58 : vector<1x128xi1>, vector<1x128xi32>
    %cst_14 = arith.constant dense<0x7F800000> : vector<128xf32>
    %60 = vector.multi_reduction <minimumf>, %46, %cst_14 [0] : vector<8x128xf32> to vector<128xf32>
    %61 = vector.shape_cast %60 : vector<128xf32> to vector<1x128xf32>
    %62 = vector.broadcast %61 : vector<1x128xf32> to vector<8x128xf32>
    %63 = arith.cmpf oeq, %46, %62 : vector<8x128xf32>
    %c8_i32_15 = arith.constant 8 : i32
    %64 = vector.broadcast %c8_i32_15 : i32 to vector<8x128xi32>
    %65 = arith.select %63, %34, %64 : vector<8x128xi1>, vector<8x128xi32>
    %cst_16 = arith.constant dense<2147483647> : vector<128xi32>
    %66 = vector.multi_reduction <minsi>, %65, %cst_16 [0] : vector<8x128xi32> to vector<128xi32>
    %67 = vector.shape_cast %66 : vector<128xi32> to vector<1x128xi32>
    %68 = vector.broadcast %67 : vector<1x128xi32> to vector<8x128xi32>
    %69 = arith.cmpi eq, %34, %68 : vector<8x128xi32>
    %cst_17 = arith.constant 0x7F800000 : f32
    %70 = vector.broadcast %cst_17 : f32 to vector<8x128xf32>
    %71 = arith.select %69, %70, %46 : vector<8x128xi1>, vector<8x128xf32>
    %72 = arith.cmpf olt, %61, %50 : vector<1x128xf32>
    %73 = arith.cmpf olt, %61, %53 : vector<1x128xf32>
    %74 = arith.cmpf olt, %61, %57 : vector<1x128xf32>
    %75 = arith.select %72, %61, %50 : vector<1x128xi1>, vector<1x128xf32>
    %76 = arith.select %72, %67, %51 : vector<1x128xi1>, vector<1x128xi32>
    %77 = arith.select %73, %61, %53 : vector<1x128xi1>, vector<1x128xf32>
    %78 = arith.select %72, %50, %77 : vector<1x128xi1>, vector<1x128xf32>
    %79 = arith.select %73, %67, %55 : vector<1x128xi1>, vector<1x128xi32>
    %80 = arith.select %72, %51, %79 : vector<1x128xi1>, vector<1x128xi32>
    %81 = arith.select %74, %61, %57 : vector<1x128xi1>, vector<1x128xf32>
    %82 = arith.select %73, %53, %81 : vector<1x128xi1>, vector<1x128xf32>
    %83 = arith.select %74, %67, %59 : vector<1x128xi1>, vector<1x128xi32>
    %84 = arith.select %73, %55, %83 : vector<1x128xi1>, vector<1x128xi32>
    %cst_18 = arith.constant dense<0x7F800000> : vector<128xf32>
    %85 = vector.multi_reduction <minimumf>, %71, %cst_18 [0] : vector<8x128xf32> to vector<128xf32>
    %86 = vector.shape_cast %85 : vector<128xf32> to vector<1x128xf32>
    %87 = vector.broadcast %86 : vector<1x128xf32> to vector<8x128xf32>
    %88 = arith.cmpf oeq, %71, %87 : vector<8x128xf32>
    %c8_i32_19 = arith.constant 8 : i32
    %89 = vector.broadcast %c8_i32_19 : i32 to vector<8x128xi32>
    %90 = arith.select %88, %34, %89 : vector<8x128xi1>, vector<8x128xi32>
    %cst_20 = arith.constant dense<2147483647> : vector<128xi32>
    %91 = vector.multi_reduction <minsi>, %90, %cst_20 [0] : vector<8x128xi32> to vector<128xi32>
    %92 = vector.shape_cast %91 : vector<128xi32> to vector<1x128xi32>
    %93 = arith.cmpf olt, %86, %75 : vector<1x128xf32>
    %94 = arith.cmpf olt, %86, %78 : vector<1x128xf32>
    %95 = arith.cmpf olt, %86, %82 : vector<1x128xf32>
    %96 = arith.select %93, %86, %75 : vector<1x128xi1>, vector<1x128xf32>
    %97 = arith.select %93, %92, %76 : vector<1x128xi1>, vector<1x128xi32>
    %98 = arith.select %94, %86, %78 : vector<1x128xi1>, vector<1x128xf32>
    %99 = arith.select %93, %75, %98 : vector<1x128xi1>, vector<1x128xf32>
    %100 = arith.select %94, %92, %80 : vector<1x128xi1>, vector<1x128xi32>
    %101 = arith.select %93, %76, %100 : vector<1x128xi1>, vector<1x128xi32>
    %102 = arith.select %95, %86, %82 : vector<1x128xi1>, vector<1x128xf32>
    %103 = arith.select %94, %78, %102 : vector<1x128xi1>, vector<1x128xf32>
    %104 = arith.select %95, %92, %84 : vector<1x128xi1>, vector<1x128xi32>
    %105 = arith.select %94, %80, %104 : vector<1x128xi1>, vector<1x128xi32>
    %cst_21 = arith.constant 9.99999993E-9 : f32
    %106 = vector.broadcast %cst_21 : f32 to vector<1x128xf32>
    %107 = arith.addf %96, %106 : vector<1x128xf32>
    %108 = tpu.reciprocal %107 {approx = true} : vector<1x128xf32> -> vector<1x128xf32>
    %cst_22 = arith.constant 9.99999993E-9 : f32
    %109 = vector.broadcast %cst_22 : f32 to vector<1x128xf32>
    %110 = arith.addf %99, %109 : vector<1x128xf32>
    %111 = tpu.reciprocal %110 {approx = true} : vector<1x128xf32> -> vector<1x128xf32>
    %cst_23 = arith.constant 9.99999993E-9 : f32
    %112 = vector.broadcast %cst_23 : f32 to vector<1x128xf32>
    %113 = arith.addf %103, %112 : vector<1x128xf32>
    %114 = tpu.reciprocal %113 {approx = true} : vector<1x128xf32> -> vector<1x128xf32>
    %115 = arith.addf %108, %111 : vector<1x128xf32>
    %116 = arith.addf %115, %114 : vector<1x128xf32>
    %117 = tpu.reciprocal %116 {approx = true} : vector<1x128xf32> -> vector<1x128xf32>
    %118 = arith.mulf %108, %117 : vector<1x128xf32>
    %119 = arith.mulf %111, %117 : vector<1x128xf32>
    %120 = arith.mulf %114, %117 : vector<1x128xf32>
    %cst_24 = arith.constant 0.000000e+00 : f32
    %121 = vector.broadcast %cst_24 : f32 to vector<6x128xf32>
    %122 = tpu.iota {dimensions = array<i32: 0>} : vector<8x128xi32>
    %c0_i32_25 = arith.constant 0 : i32
    %123 = vector.broadcast %c0_i32_25 : i32 to vector<8x128xi32>
    %124 = arith.addi %122, %123 : vector<8x128xi32>
    %cst_26 = arith.constant 0.000000e+00 : f32
    %125 = vector.broadcast %cst_26 : f32 to vector<8x128xf32>
    %126 = vector.broadcast %97 : vector<1x128xi32> to vector<8x128xi32>
    %127 = arith.cmpi eq, %124, %126 : vector<8x128xi32>
    %cst_27 = arith.constant 0.000000e+00 : f32
    %128 = vector.shape_cast %118 : vector<1x128xf32> to vector<1x128xf32>
    %129 = vector.broadcast %128 : vector<1x128xf32> to vector<8x128xf32>
    %130 = vector.broadcast %cst_27 : f32 to vector<8x128xf32>
    %131 = arith.select %127, %129, %130 : vector<8x128xi1>, vector<8x128xf32>
    %132 = arith.addf %125, %131 : vector<8x128xf32>
    %133 = vector.broadcast %101 : vector<1x128xi32> to vector<8x128xi32>
    %134 = arith.cmpi eq, %124, %133 : vector<8x128xi32>
    %cst_28 = arith.constant 0.000000e+00 : f32
    %135 = vector.shape_cast %119 : vector<1x128xf32> to vector<1x128xf32>
    %136 = vector.broadcast %135 : vector<1x128xf32> to vector<8x128xf32>
    %137 = vector.broadcast %cst_28 : f32 to vector<8x128xf32>
    %138 = arith.select %134, %136, %137 : vector<8x128xi1>, vector<8x128xf32>
    %139 = arith.addf %132, %138 : vector<8x128xf32>
    %140 = vector.broadcast %105 : vector<1x128xi32> to vector<8x128xi32>
    %141 = arith.cmpi eq, %124, %140 : vector<8x128xi32>
    %cst_29 = arith.constant 0.000000e+00 : f32
    %142 = vector.shape_cast %120 : vector<1x128xf32> to vector<1x128xf32>
    %143 = vector.broadcast %142 : vector<1x128xf32> to vector<8x128xf32>
    %144 = vector.broadcast %cst_29 : f32 to vector<8x128xf32>
    %145 = arith.select %141, %143, %144 : vector<8x128xi1>, vector<8x128xf32>
    %146 = arith.addf %139, %145 : vector<8x128xf32>
    %c0_30 = arith.constant 0 : index
    %c0_31 = arith.constant 0 : index
    %c0_32 = arith.constant 0 : index
    %147 = vector.load %arg4[%c0_30, %c0_31, %c0_32] : memref<1x6x8xbf16, #tpu.memory_space<vmem>>, vector<1x6x8xbf16>
    %148 = vector.shape_cast %147 : vector<1x6x8xbf16> to vector<6x8xbf16>
    %149 = arith.truncf %146 : vector<8x128xf32> to vector<8x128xbf16>
    %cst_33 = arith.constant dense<0.000000e+00> : vector<6x128xf32>
    %150 = tpu.matmul %148, %149, %cst_33 {dimension_numbers = #tpu.dot_dimension_numbers<[1], [0], [0], [1], [0, 0, 1, 1], [], []>} : vector<6x8xbf16>, vector<8x128xbf16>, vector<6x128xf32> -> vector<6x128xf32>
    %151 = arith.addf %121, %150 : vector<6x128xf32>
    %c0_34 = arith.constant 0 : index
    %c0_35 = arith.constant 0 : index
    %c0_36 = arith.constant 0 : index
    %152 = vector.load %arg5[%c0_34, %c0_35, %c0_36] : memref<1x4x128xbf16, #tpu.memory_space<vmem>>, vector<1x4x128xbf16>
    %153 = vector.shape_cast %152 : vector<1x4x128xbf16> to vector<4x128xbf16>
    %c0_37 = arith.constant 0 : index
    %c0_38 = arith.constant 0 : index
    %154 = vector.load %arg6[%c0_37, %c0_38] : memref<32x4xbf16, #tpu.memory_space<vmem>>, vector<32x4xbf16>
    %cst_39 = arith.constant dense<0.000000e+00> : vector<32x128xf32>
    %155 = tpu.matmul %154, %153, %cst_39 {dimension_numbers = #tpu.dot_dimension_numbers<[1], [0], [0], [1], [0, 0, 1, 1], [], []>} : vector<32x4xbf16>, vector<4x128xbf16>, vector<32x128xf32> -> vector<32x128xf32>
    %c0_40 = arith.constant 0 : index
    %c0_41 = arith.constant 0 : index
    %156 = vector.load %arg7[%c0_40, %c0_41] : memref<32x6xbf16, #tpu.memory_space<vmem>>, vector<32x6xbf16>
    %157 = arith.truncf %151 : vector<6x128xf32> to vector<6x128xbf16>
    %cst_42 = arith.constant dense<0.000000e+00> : vector<32x128xf32>
    %158 = tpu.matmul %156, %157, %cst_42 {dimension_numbers = #tpu.dot_dimension_numbers<[1], [0], [0], [1], [0, 0, 1, 1], [], []>} : vector<32x6xbf16>, vector<6x128xbf16>, vector<32x128xf32> -> vector<32x128xf32>
    %159 = arith.addf %155, %158 : vector<32x128xf32>
    %c0_43 = arith.constant 0 : index
    %c0_44 = arith.constant 0 : index
    %160 = vector.load %arg8[%c0_43, %c0_44] : memref<32x1xf32, #tpu.memory_space<vmem>>, vector<32x1xf32>
    %161 = vector.broadcast %160 : vector<32x1xf32> to vector<32x128xf32>
    %162 = arith.addf %159, %161 : vector<32x128xf32>
    %cst_45 = arith.constant 0.000000e+00 : f32
    %163 = vector.broadcast %cst_45 : f32 to vector<32x128xf32>
    %164 = arith.maximumf %162, %163 : vector<32x128xf32>
    %c0_46 = arith.constant 0 : index
    %c0_47 = arith.constant 0 : index
    %165 = vector.load %arg9[%c0_46, %c0_47] : memref<16x32xbf16, #tpu.memory_space<vmem>>, vector<16x32xbf16>
    %166 = arith.truncf %164 : vector<32x128xf32> to vector<32x128xbf16>
    %cst_48 = arith.constant dense<0.000000e+00> : vector<16x128xf32>
    %167 = tpu.matmul %165, %166, %cst_48 {dimension_numbers = #tpu.dot_dimension_numbers<[1], [0], [0], [1], [0, 0, 1, 1], [], []>} : vector<16x32xbf16>, vector<32x128xbf16>, vector<16x128xf32> -> vector<16x128xf32>
    %c0_49 = arith.constant 0 : index
    %c0_50 = arith.constant 0 : index
    %168 = vector.load %arg10[%c0_49, %c0_50] : memref<16x1xf32, #tpu.memory_space<vmem>>, vector<16x1xf32>
    %169 = vector.broadcast %168 : vector<16x1xf32> to vector<16x128xf32>
    %170 = arith.addf %167, %169 : vector<16x128xf32>
    %cst_51 = arith.constant 0.000000e+00 : f32
    %171 = vector.broadcast %cst_51 : f32 to vector<16x128xf32>
    %172 = arith.maximumf %170, %171 : vector<16x128xf32>
    %c0_52 = arith.constant 0 : index
    %c0_53 = arith.constant 0 : index
    %c0_54 = arith.constant 0 : index
    %173 = vector.load %arg11[%c0_52, %c0_53, %c0_54] : memref<1x16x128xf32, #tpu.memory_space<vmem>>, vector<1x16x128xf32>
    %174 = vector.shape_cast %173 : vector<1x16x128xf32> to vector<16x128xf32>
    %175 = vector.shape_cast %172 : vector<16x128xf32> to vector<1x16x128xf32>
    tpu.vector_store %arg11[%c0_52, %c0_53, %c0_54], %175 {strides = array<i32>} : memref<1x16x128xf32, #tpu.memory_space<vmem>>, vector<1x16x128xf32>,
    return
  }
  func.func @transform_0(%arg0: i32, %arg1: i32) -> (i32, i32, i32) {
    %c0_i32 = arith.constant 0 : i32
    %c0_i32_0 = arith.constant 0 : i32
    return %arg0, %c0_i32, %arg1 : i32, i32, i32
  }
  func.func @transform_1(%arg0: i32, %arg1: i32) -> (i32, i32, i32) {
    %c0_i32 = arith.constant 0 : i32
    %c0_i32_0 = arith.constant 0 : i32
    %c0_i32_1 = arith.constant 0 : i32
    return %arg0, %c0_i32, %c0_i32_0 : i32, i32, i32
  }
  func.func @transform_2(%arg0: i32, %arg1: i32) -> (i32, i32, i32) {
    %c0_i32 = arith.constant 0 : i32
    %c0_i32_0 = arith.constant 0 : i32
    %c0_i32_1 = arith.constant 0 : i32
    return %arg0, %c0_i32, %c0_i32_0 : i32, i32, i32
  }
  func.func @transform_3(%arg0: i32, %arg1: i32) -> (i32, i32, i32) {
    %c0_i32 = arith.constant 0 : i32
    %c0_i32_0 = arith.constant 0 : i32
    return %arg0, %c0_i32, %arg1 : i32, i32, i32
  }
  func.func @transform_4(%arg0: i32, %arg1: i32) -> (i32, i32) {
    %c0_i32 = arith.constant 0 : i32
    %c0_i32_0 = arith.constant 0 : i32
    %c0_i32_1 = arith.constant 0 : i32
    return %c0_i32, %c0_i32_0 : i32, i32
  }
  func.func @transform_5(%arg0: i32, %arg1: i32) -> (i32, i32) {
    %c0_i32 = arith.constant 0 : i32
    %c0_i32_0 = arith.constant 0 : i32
    %c0_i32_1 = arith.constant 0 : i32
    return %c0_i32, %c0_i32_0 : i32, i32
  }
  func.func @transform_6(%arg0: i32, %arg1: i32) -> (i32, i32) {
    %c0_i32 = arith.constant 0 : i32
    %c0_i32_0 = arith.constant 0 : i32
    %c0_i32_1 = arith.constant 0 : i32
    return %c0_i32, %c0_i32_0 : i32, i32
  }
  func.func @transform_7(%arg0: i32, %arg1: i32) -> (i32, i32) {
    %c0_i32 = arith.constant 0 : i32
    %c0_i32_0 = arith.constant 0 : i32
    %c0_i32_1 = arith.constant 0 : i32
    return %c0_i32, %c0_i32_0 : i32, i32
  }
  func.func @transform_8(%arg0: i32, %arg1: i32) -> (i32, i32) {
    %c0_i32 = arith.constant 0 : i32
    %c0_i32_0 = arith.constant 0 : i32
    %c0_i32_1 = arith.constant 0 : i32
    return %c0_i32, %c0_i32_0 : i32, i32
  }
  func.func @transform_9(%arg0: i32, %arg1: i32) -> (i32, i32, i32) {
    %c0_i32 = arith.constant 0 : i32
    %c0_i32_0 = arith.constant 0 : i32
    return %arg0, %c0_i32, %arg1 : i32, i32, i32
  }
}

</mosaic_0001>

<llo_original>
// kernel: tpu_custom_call.1
$region0: #{tpu_custom_call.1}
  #allocation0 [shape = 'u32[]', space=smem, size = 0x4, offset = 0x4, fixed_abs, tag = 'smem constant byte address 0x4 - core index']
  #allocation1 [shape = 'u32[144,128]{1,0:T(1,128)}', space=vmem, size = 0x12000, scoped, tag = 'internal scratch']
  %s0 = inlined_call_operand.vmem [shape: f32[2,3,128], index: 0, kind: input, shape index: {}]
  %s1 = inlined_call_operand.vmem [shape: f32[2,8,3], index: 1, kind: input, shape index: {}]
  %s2 = inlined_call_operand.vmem [shape: bf16[2,6,8], index: 2, kind: input, shape index: {}]
  %s3 = inlined_call_operand.vmem [shape: bf16[2,4,128], index: 3, kind: input, shape index: {}]
  %s4 = inlined_call_operand.vmem [shape: bf16[32,4], index: 4, kind: input, shape index: {}]
  %s5 = inlined_call_operand.vmem [shape: bf16[32,6], index: 5, kind: input, shape index: {}]
  %s6 = inlined_call_operand.vmem [shape: f32[32,1], index: 6, kind: input, shape index: {}]
  %s7 = inlined_call_operand.vmem [shape: bf16[16,32], index: 7, kind: input, shape index: {}]
  %s8 = inlined_call_operand.vmem [shape: f32[16,1], index: 8, kind: input, shape index: {}]
  %s9 = inlined_call_operand.hbm [shape: f32[2,16,128], index: 9, kind: output, shape index: {}]
  %s10 = sld [smem:[#allocation0]]
  $region69: #{tpu_custom_call.1} parent=0
    _
  %s12 = ssub.s32 1, %s10
  %s13 = scalar_select 0, %s12, %s10
  $region1: #{tpu_custom_call.1} parent=0
    #allocation2 [shape = 'u8[16384]{0}', space=vmem, size = 0x4000, scoped, tag = 'output window, operand 0']
    #allocation3 [shape = 's32[2]{0}', space=sflag, size = 0x8, scoped, tag = 'scoped memory for tpu_custom_call.1']
    %14 = vsyncpa [#allocation3], 0
    %s15 = scalar_lea.sflag [#allocation3], 1
    %16 = vsyncpa %s15, 0
    loop: start=0, step=1, limit=4
    $region2: #{tpu_custom_call.1} parent=1 // loop_pre_header
      _
    $region3: #{tpu_custom_call.1} parent=1 // loop_header
      %s18 = sphi 0, %s22
      %p19 = scmp.ge.s32.totalorder %s18, 4
      %s25 = sphi 0, %s37
      %s26 = sphi 0, %s33
      %s27 = sphi 0, %s25
      %s28 = sphi 0, %s26
      %s29 = sphi 0, %s27
      %s30 = sphi 0, %s28
      %s42 = sphi 0, %s44
      %s45 = sphi 0, %s42
      %s46 = sphi 0, %s45
      %s62 = sphi 0, %s46
      %s68 = sphi 0, %s70
      %s71 = sphi 0, %s68
      %s72 = sphi 0, %s71
      %s88 = sphi 0, %s72
      %s94 = sphi 0, %s96
      %s97 = sphi 0, %s94
      %s98 = sphi 0, %s97
      %s114 = sphi 0, %s98
      %s122 = sphi 0, %s124
      %s125 = sphi 0, %s122
      %s126 = sphi 0, %s125
      %s142 = sphi 0, %s126
      %s146 = sphi 0, %s146
      %s148 = sphi 0, %s146
      %s149 = sphi 0, %s148
      %s163 = sphi 0, %s149
      %s167 = sphi 0, %s167
      %s169 = sphi 0, %s167
      %s170 = sphi 0, %s169
      %s184 = sphi 0, %s170
      %s188 = sphi 0, %s188
      %s190 = sphi 0, %s188
      %s191 = sphi 0, %s190
      %s205 = sphi 0, %s191
      %s209 = sphi 0, %s209
      %s211 = sphi 0, %s209
      %s212 = sphi 0, %s211
      %s226 = sphi 0, %s212
      %s230 = sphi 0, %s230
      %s232 = sphi 0, %s230
      %s233 = sphi 0, %s232
      %s247 = sphi 0, %s233
      %s255 = sphi 0, %s257
      %s258 = sphi 0, %s255
      %s259 = sphi 0, %s258
      %s275 = sphi 0, %s259
    $region4: #{tpu_custom_call.1} parent=1 // loop_header_branch
      %21 = sbr.rel (%p19) target = $region8
    $region5: #{tpu_custom_call.1} parent=1 // loop_body
      %s23 = ssub.s32 %s18, 1
      %s24 = ssub.s32 %s18, 2
      %s31 = sadd.s32 1, %s26
      %p32 = scmp.ge.s32.totalorder %s31, 1
      %s33 = scalar_select %p32, 0, %s31
      %s34 = sadd.s32 1, %s25
      %s35 = scalar_select %p32, %s34, %s25
      %p36 = scmp.ge.s32.totalorder %s35, 2
      %s37 = scalar_select %p36, 0, %s35
      %s38 = ssub.s32 %s25, %s37
      %s39 = ssub.s32 %s26, %s33
      %s40 = sor.u32 %s38, %s39
      %p41 = scmp.eq.s32.totalorder %s40, 0
      %s43 = sadd.s32 %s42, 1
      %s44 = scalar_select %p41, %s42, %s43
      %p47 = pneg %p41
      %p48 = scmp.eq.s32.totalorder %s18, 1
      %p49 = por %p47, %p48
      %p50 = scmp.ne.s32.totalorder %s42, %s45
      %p51 = scmp.eq.s32.totalorder %s18, 0
      %p52 = por %p50, %p51
      %p53 = scmp.ne.s32.totalorder %s42, %s45
      %p54 = scmp.eq.s32.totalorder %s23, 1
      %p55 = por %p53, %p54
      %p56 = scmp.ne.s32.totalorder %s45, %s46
      %p57 = scmp.eq.s32.totalorder %s23, 0
      %p58 = por %p56, %p57
      %p59 = scmp.ne.s32.totalorder %s45, %s46
      %p60 = scmp.eq.s32.totalorder %s24, 1
      %p61 = por %p59, %p60
      %p63 = scmp.ne.s32.totalorder %s46, %s62
      %p64 = scmp.eq.s32.totalorder %s24, 0
      %p65 = por %p63, %p64
      %s66 = ssub.s32 %s25, %s37
      %p67 = scmp.eq.s32.totalorder %s66, 0
      %s69 = sadd.s32 %s68, 1
      %s70 = scalar_select %p67, %s68, %s69
      %p73 = pneg %p67
      %p74 = scmp.eq.s32.totalorder %s18, 1
      %p75 = por %p73, %p74
      %p76 = scmp.ne.s32.totalorder %s68, %s71
      %p77 = scmp.eq.s32.totalorder %s18, 0
      %p78 = por %p76, %p77
      %p79 = scmp.ne.s32.totalorder %s68, %s71
      %p80 = scmp.eq.s32.totalorder %s23, 1
      %p81 = por %p79, %p80
      %p82 = scmp.ne.s32.totalorder %s71, %s72
      %p83 = scmp.eq.s32.totalorder %s23, 0
      %p84 = por %p82, %p83
      %p85 = scmp.ne.s32.totalorder %s71, %s72
      %p86 = scmp.eq.s32.totalorder %s24, 1
      %p87 = por %p85, %p86
      %p89 = scmp.ne.s32.totalorder %s72, %s88
      %p90 = scmp.eq.s32.totalorder %s24, 0
      %p91 = por %p89, %p90
      %s92 = ssub.s32 %s25, %s37
      %p93 = scmp.eq.s32.totalorder %s92, 0
      %s95 = sadd.s32 %s94, 1
      %s96 = scalar_select %p93, %s94, %s95
      %p99 = pneg %p93
      %p100 = scmp.eq.s32.totalorder %s18, 1
      %p101 = por %p99, %p100
      %p102 = scmp.ne.s32.totalorder %s94, %s97
      %p103 = scmp.eq.s32.totalorder %s18, 0
      %p104 = por %p102, %p103
      %p105 = scmp.ne.s32.totalorder %s94, %s97
      %p106 = scmp.eq.s32.totalorder %s23, 1
      %p107 = por %p105, %p106
      %p108 = scmp.ne.s32.totalorder %s97, %s98
      %p109 = scmp.eq.s32.totalorder %s23, 0
      %p110 = por %p108, %p109
      %p111 = scmp.ne.s32.totalorder %s97, %s98
      %p112 = scmp.eq.s32.totalorder %s24, 1
      %p113 = por %p111, %p112
      %p115 = scmp.ne.s32.totalorder %s98, %s114
      %p116 = scmp.eq.s32.totalorder %s24, 0
      %p117 = por %p115, %p116
      %s118 = ssub.s32 %s25, %s37
      %s119 = ssub.s32 %s26, %s33
      %s120 = sor.u32 %s118, %s119
      %p121 = scmp.eq.s32.totalorder %s120, 0
      %s123 = sadd.s32 %s122, 1
      %s124 = scalar_select %p121, %s122, %s123
      %p127 = pneg %p121
      %p128 = scmp.eq.s32.totalorder %s18, 1
      %p129 = por %p127, %p128
      %p130 = scmp.ne.s32.totalorder %s122, %s125
      %p131 = scmp.eq.s32.totalorder %s18, 0
      %p132 = por %p130, %p131
      %p133 = scmp.ne.s32.totalorder %s122, %s125
      %p134 = scmp.eq.s32.totalorder %s23, 1
      %p135 = por %p133, %p134
      %p136 = scmp.ne.s32.totalorder %s125, %s126
      %p137 = scmp.eq.s32.totalorder %s23, 0
      %p138 = por %p136, %p137
      %p139 = scmp.ne.s32.totalorder %s125, %s126
      %p140 = scmp.eq.s32.totalorder %s24, 1
      %p141 = por %p139, %p140
      %p143 = scmp.ne.s32.totalorder %s126, %s142
      %p144 = scmp.eq.s32.totalorder %s24, 0
      %p145 = por %p143, %p144
      %s147 = sadd.s32 %s146, 1
      %p150 = scmp.eq.s32.totalorder %s18, 1
      %p151 = scmp.ne.s32.totalorder %s146, %s148
      %p152 = scmp.eq.s32.totalorder %s18, 0
      %p153 = por %p151, %p152
      %p154 = scmp.ne.s32.totalorder %s146, %s148
      %p155 = scmp.eq.s32.totalorder %s23, 1
      %p156 = por %p154, %p155
      %p157 = scmp.ne.s32.totalorder %s148, %s149
      %p158 = scmp.eq.s32.totalorder %s23, 0
      %p159 = por %p157, %p158
      %p160 = scmp.ne.s32.totalorder %s148, %s149
      %p161 = scmp.eq.s32.totalorder %s24, 1
      %p162 = por %p160, %p161
      %p164 = scmp.ne.s32.totalorder %s149, %s163
      %p165 = scmp.eq.s32.totalorder %s24, 0
      %p166 = por %p164, %p165
      %s168 = sadd.s32 %s167, 1
      %p171 = scmp.eq.s32.totalorder %s18, 1
      %p172 = scmp.ne.s32.totalorder %s167, %s169
      %p173 = scmp.eq.s32.totalorder %s18, 0
      %p174 = por %p172, %p173
      %p175 = scmp.ne.s32.totalorder %s167, %s169
      %p176 = scmp.eq.s32.totalorder %s23, 1
      %p177 = por %p175, %p176
      %p178 = scmp.ne.s32.totalorder %s169, %s170
      %p179 = scmp.eq.s32.totalorder %s23, 0
      %p180 = por %p178, %p179
      %p181 = scmp.ne.s32.totalorder %s169, %s170
      %p182 = scmp.eq.s32.totalorder %s24, 1
      %p183 = por %p181, %p182
      %p185 = scmp.ne.s32.totalorder %s170, %s184
      %p186 = scmp.eq.s32.totalorder %s24, 0
      %p187 = por %p185, %p186
      %s189 = sadd.s32 %s188, 1
      %p192 = scmp.eq.s32.totalorder %s18, 1
      %p193 = scmp.ne.s32.totalorder %s188, %s190
      %p194 = scmp.eq.s32.totalorder %s18, 0
      %p195 = por %p193, %p194
      %p196 = scmp.ne.s32.totalorder %s188, %s190
      %p197 = scmp.eq.s32.totalorder %s23, 1
      %p198 = por %p196, %p197
      %p199 = scmp.ne.s32.totalorder %s190, %s191
      %p200 = scmp.eq.s32.totalorder %s23, 0
      %p201 = por %p199, %p200
      %p202 = scmp.ne.s32.totalorder %s190, %s191
      %p203 = scmp.eq.s32.totalorder %s24, 1
      %p204 = por %p202, %p203
      %p206 = scmp.ne.s32.totalorder %s191, %s205
      %p207 = scmp.eq.s32.totalorder %s24, 0
      %p208 = por %p206, %p207
      %s210 = sadd.s32 %s209, 1
      %p213 = scmp.eq.s32.totalorder %s18, 1
      %p214 = scmp.ne.s32.totalorder %s209, %s211
      %p215 = scmp.eq.s32.totalorder %s18, 0
      %p216 = por %p214, %p215
      %p217 = scmp.ne.s32.totalorder %s209, %s211
      %p218 = scmp.eq.s32.totalorder %s23, 1
      %p219 = por %p217, %p218
      %p220 = scmp.ne.s32.totalorder %s211, %s212
      %p221 = scmp.eq.s32.totalorder %s23, 0
      %p222 = por %p220, %p221
      %p223 = scmp.ne.s32.totalorder %s211, %s212
      %p224 = scmp.eq.s32.totalorder %s24, 1
      %p225 = por %p223, %p224
      %p227 = scmp.ne.s32.totalorder %s212, %s226
      %p228 = scmp.eq.s32.totalorder %s24, 0
      %p229 = por %p227, %p228
      %s231 = sadd.s32 %s230, 1
      %p234 = scmp.eq.s32.totalorder %s18, 1
      %p235 = scmp.ne.s32.totalorder %s230, %s232
      %p236 = scmp.eq.s32.totalorder %s18, 0
      %p237 = por %p235, %p236
      %p238 = scmp.ne.s32.totalorder %s230, %s232
      %p239 = scmp.eq.s32.totalorder %s23, 1
      %p240 = por %p238, %p239
      %p241 = scmp.ne.s32.totalorder %s232, %s233
      %p242 = scmp.eq.s32.totalorder %s23, 0
      %p243 = por %p241, %p242
      %p244 = scmp.ne.s32.totalorder %s232, %s233
      %p245 = scmp.eq.s32.totalorder %s24, 1
      %p246 = por %p244, %p245
      %p248 = scmp.ne.s32.totalorder %s233, %s247
      %p249 = scmp.eq.s32.totalorder %s24, 0
      %p250 = por %p248, %p249
      %s251 = ssub.s32 %s25, %s37
      %s252 = ssub.s32 %s26, %s33
      %s253 = sor.u32 %s251, %s252
      %p254 = scmp.eq.s32.totalorder %s253, 0
      %s256 = sadd.s32 %s255, 1
      %s257 = scalar_select %p254, %s255, %s256
      %p260 = pneg %p254
      %p261 = scmp.eq.s32.totalorder %s18, 1
      %p262 = por %p260, %p261
      %p263 = scmp.ne.s32.totalorder %s255, %s258
      %p264 = scmp.eq.s32.totalorder %s18, 0
      %p265 = por %p263, %p264
      %p266 = scmp.ne.s32.totalorder %s255, %s258
      %p267 = scmp.eq.s32.totalorder %s23, 1
      %p268 = por %p266, %p267
      %p269 = scmp.ne.s32.totalorder %s258, %s259
      %p270 = scmp.eq.s32.totalorder %s23, 0
      %p271 = por %p269, %p270
      %p272 = scmp.ne.s32.totalorder %s258, %s259
      %p273 = scmp.eq.s32.totalorder %s24, 1
      %p274 = por %p272, %p273
      %p276 = scmp.ne.s32.totalorder %s259, %s275
      %p277 = scmp.eq.s32.totalorder %s24, 0
      %p278 = por %p276, %p277
      %p279 = scmp.le.s32.totalorder 1, %s18
      %p280 = scmp.lt.s32.totalorder %s18, 3
      %p281 = pnand %p279, %p280
      %p282 = pneg %p281
      // Predicated region
      $region9: #{tpu_custom_call.1} parent=5 // pred_check
        _
      $region10: #{tpu_custom_call.1} parent=5 // pred_check_branch
        %284 = sbr.rel (%p281) target = $region12
      $region11: #{tpu_custom_call.1} parent=5 // pred_region
        %s285 = ssub.s32 %s18, 1
        // Predicated region
        $region13: #{tpu_custom_call.1} parent=11 // pred_check
          %p286 = pneg %p159
        $region14: #{tpu_custom_call.1} parent=11 // pred_check_branch
          %288 = sbr.rel (%p286) target = $region16
        $region15: #{tpu_custom_call.1} parent=11 // pred_region
          _
        $region16: #{tpu_custom_call.1} parent=11 // pred_fallthru
          _
        // Predicated region
        $region17: #{tpu_custom_call.1} parent=11 // pred_check
          %p289 = pneg %p180
        $region18: #{tpu_custom_call.1} parent=11 // pred_check_branch
          %291 = sbr.rel (%p289) target = $region20
        $region19: #{tpu_custom_call.1} parent=11 // pred_region
          _
        $region20: #{tpu_custom_call.1} parent=11 // pred_fallthru
          _
        // Predicated region
        $region21: #{tpu_custom_call.1} parent=11 // pred_check
          %p292 = pneg %p201
        $region22: #{tpu_custom_call.1} parent=11 // pred_check_branch
          %294 = sbr.rel (%p292) target = $region24
        $region23: #{tpu_custom_call.1} parent=11 // pred_region
          _
        $region24: #{tpu_custom_call.1} parent=11 // pred_fallthru
          _
        // Predicated region
        $region25: #{tpu_custom_call.1} parent=11 // pred_check
          %p295 = pneg %p222
        $region26: #{tpu_custom_call.1} parent=11 // pred_check_branch
          %297 = sbr.rel (%p295) target = $region28
        $region27: #{tpu_custom_call.1} parent=11 // pred_region
          _
        $region28: #{tpu_custom_call.1} parent=11 // pred_fallthru
          _
        // Predicated region
        $region29: #{tpu_custom_call.1} parent=11 // pred_check
          %p298 = pneg %p243
        $region30: #{tpu_custom_call.1} parent=11 // pred_check_branch
          %300 = sbr.rel (%p298) target = $region32
        $region31: #{tpu_custom_call.1} parent=11 // pred_region
          _
        $region32: #{tpu_custom_call.1} parent=11 // pred_fallthru
          _
      $region12: #{tpu_custom_call.1} parent=5 // pred_fallthru
        _
      %p301 = scmp.lt.s32.totalorder %s18, 2
      // Predicated region
      $region33: #{tpu_custom_call.1} parent=5 // pred_check
        %p302 = pneg %p301
      $region34: #{tpu_custom_call.1} parent=5 // pred_check_branch
        %304 = sbr.rel (%p302) target = $region36
      $region35: #{tpu_custom_call.1} parent=5 // pred_region
        // Predicated region
        $region37: #{tpu_custom_call.1} parent=35 // pred_check
          %p305 = pneg %p52
        $region38: #{tpu_custom_call.1} parent=35 // pred_check_branch
          %307 = sbr.rel (%p305) target = $region40
        $region39: #{tpu_custom_call.1} parent=35 // pred_region
          %p308 = scmp.lt.s32.totalorder %s25, 1
          %s309 = scalar_select %p308, %s25, 1
          %p310 = scmp.lt.s32.totalorder %s26, 0
          %s311 = scalar_select %p310, %s26, 0
          %s312 = sadd.s32 %s311, %s309
          %s313 = smul.addr %s312, 4
          %s314 = scalar_lea.vmem %s0, %s313
        $region40: #{tpu_custom_call.1} parent=35 // pred_fallthru
          _
        // Predicated region
        $region41: #{tpu_custom_call.1} parent=35 // pred_check
          %p315 = pneg %p78
        $region42: #{tpu_custom_call.1} parent=35 // pred_check_branch
          %317 = sbr.rel (%p315) target = $region44
        $region43: #{tpu_custom_call.1} parent=35 // pred_region
          %p318 = scmp.lt.s32.totalorder %s25, 1
          %s319 = scalar_select %p318, %s25, 1
          %s320 = smul.addr %s319, 8
          %s321 = scalar_lea.vmem %s1, %s320
        $region44: #{tpu_custom_call.1} parent=35 // pred_fallthru
          _
        // Predicated region
        $region45: #{tpu_custom_call.1} parent=35 // pred_check
          %p322 = pneg %p104
        $region46: #{tpu_custom_call.1} parent=35 // pred_check_branch
          %324 = sbr.rel (%p322) target = $region48
        $region47: #{tpu_custom_call.1} parent=35 // pred_region
          %p325 = scmp.lt.s32.totalorder %s25, 1
          %s326 = scalar_select %p325, %s25, 1
          %s327 = smul.addr %s326, 4
          %s328 = scalar_lea.vmem %s2, %s327
        $region48: #{tpu_custom_call.1} parent=35 // pred_fallthru
          _
        // Predicated region
        $region49: #{tpu_custom_call.1} parent=35 // pred_check
          %p329 = pneg %p132
        $region50: #{tpu_custom_call.1} parent=35 // pred_check_branch
          %331 = sbr.rel (%p329) target = $region52
        $region51: #{tpu_custom_call.1} parent=35 // pred_region
          %p332 = scmp.lt.s32.totalorder %s25, 1
          %s333 = scalar_select %p332, %s25, 1
          %p334 = scmp.lt.s32.totalorder %s26, 0
          %s335 = scalar_select %p334, %s26, 0
          %s336 = sadd.s32 %s335, %s333
          %s337 = smul.addr %s336, 2
          %s338 = scalar_lea.vmem %s3, %s337
        $region52: #{tpu_custom_call.1} parent=35 // pred_fallthru
          _
      $region36: #{tpu_custom_call.1} parent=5 // pred_fallthru
        _
      %p339 = scmp.le.s32.totalorder 1, %s18
      %p340 = scmp.lt.s32.totalorder %s18, 3
      %p341 = pnand %p339, %p340
      %p342 = pneg %p341
      // Predicated region
      $region53: #{tpu_custom_call.1} parent=5 // pred_check
        _
      $region54: #{tpu_custom_call.1} parent=5 // pred_check_branch
        %344 = sbr.rel (%p341) target = $region56
      $region55: #{tpu_custom_call.1} parent=5 // pred_region
        %s345 = ssub.s32 %s18, 1
        %p346 = scmp.lt.s32.totalorder %s27, 1
        %s347 = scalar_select %p346, %s27, 1
        %p348 = scmp.lt.s32.totalorder %s28, 0
        %s349 = scalar_select %p348, %s28, 0
        %s350 = sadd.s32 %s349, %s347
        %s351 = smul.addr %s350, 4
        %s352 = scalar_lea.vmem %s0, %s351
        %p353 = pneg %p58
        %p354 = pneg %p55
        %p355 = scmp.lt.s32.totalorder %s27, 1
        %s356 = scalar_select %p355, %s27, 1
        %s357 = smul.addr %s356, 8
        %s358 = scalar_lea.vmem %s1, %s357
        %p359 = pneg %p84
        %p360 = pneg %p81
        %p361 = scmp.lt.s32.totalorder %s27, 1
        %s362 = scalar_select %p361, %s27, 1
        %s363 = smul.addr %s362, 4
        %s364 = scalar_lea.vmem %s2, %s363
        %p365 = pneg %p110
        %p366 = pneg %p107
        %p367 = scmp.lt.s32.totalorder %s27, 1
        %s368 = scalar_select %p367, %s27, 1
        %p369 = scmp.lt.s32.totalorder %s28, 0
        %s370 = scalar_select %p369, %s28, 0
        %s371 = sadd.s32 %s370, %s368
        %s372 = smul.addr %s371, 2
        %s373 = scalar_lea.vmem %s3, %s372
        %p374 = pneg %p138
        %p375 = pneg %p135
        %p376 = pneg %p159
        %p377 = pneg %p156
        %p378 = pneg %p180
        %p379 = pneg %p177
        %p380 = pneg %p201
        %p381 = pneg %p198
        %p382 = pneg %p222
        %p383 = pneg %p219
        %p384 = pneg %p243
        %p385 = pneg %p240
        %p386 = pneg %p271
        %p387 = pneg %p268
        %s388 = sand.u32 %s258, 1
        %s389 = scalar_lea.sflag [#allocation3], %s388
        %s390 = sand.u32 %s258, 1
        %s391 = smul.addr %s390, 16
        %s392 = scalar_lea.vmem [#allocation2], %s391
        %p393 = scmp.lt.s32.totalorder %s27, 1
        %s394 = scalar_select %p393, %s27, 1
        %p395 = scmp.lt.s32.totalorder %s28, 0
        %s396 = scalar_select %p395, %s28, 0
        %s397 = sadd.s32 %s396, %s394
        %s398 = smul.addr %s397, 4
        %s399 = scalar_lea.vmem %s0, %s398
        %p400 = scmp.lt.s32.totalorder %s27, 1
        %s401 = scalar_select %p400, %s27, 1
        %s402 = smul.addr %s401, 8
        %s403 = scalar_lea.vmem %s1, %s402
        %p404 = scmp.lt.s32.totalorder %s27, 1
        %s405 = scalar_select %p404, %s27, 1
        %s406 = smul.addr %s405, 4
        %s407 = scalar_lea.vmem %s2, %s406
        %p408 = scmp.lt.s32.totalorder %s27, 1
        %s409 = scalar_select %p408, %s27, 1
        %p410 = scmp.lt.s32.totalorder %s28, 0
        %s411 = scalar_select %p410, %s28, 0
        %s412 = sadd.s32 %s411, %s409
        %s413 = smul.addr %s412, 2
        %s414 = scalar_lea.vmem %s3, %s413
        %v416 = vld [vmem:[%s399] sm:$0x7]
        %v417 = vld [vmem:[%s403] sm:$0xff]
        %419 = vset.pattern.permute.xlu0 0
        %420 = vperm.xlu0 %419, %v417
        %v421 = vpop.permute.xlu0 %420
        %v423 = vlaneseq
        %v424 = vshrl.u32 %v423, 7
        %v425 = vsub.s32 0, %v424
        %v426 = vrot.slane %v416, %v425
        %v427 = vsub.f32 %v421, %v426
        %v428 = vmul.f32 %v427, %v427
        %v429 = vadd.f32 %v428, 0.0
        %430 = vset.pattern.permute.xlu0 1
        %431 = vperm.xlu0 %430, %v417
        %v432 = vpop.permute.xlu0 %431
        %v434 = vlaneseq
        %v435 = vshrl.u32 %v434, 7
        %v436 = vsub.s32 1, %v435
        %v437 = vrot.slane %v416, %v436
        %v438 = vsub.f32 %v432, %v437
        %v439 = vmul.f32 %v438, %v438
        %v440 = vadd.f32 %v429, %v439
        %441 = vset.pattern.permute.xlu0 2
        %442 = vperm.xlu0 %441, %v417
        %v443 = vpop.permute.xlu0 %442
        %v445 = vlaneseq
        %v446 = vshrl.u32 %v445, 7
        %v447 = vsub.s32 2, %v446
        %v448 = vrot.slane %v416, %v447
        %v449 = vsub.f32 %v443, %v448
        %v450 = vmul.f32 %v449, %v449
        %v451 = vadd.f32 %v440, %v450
        %v452 = vlaneseq
        %v453 = vshrl.u32 %v452, 7
        %v454 = vrot.slane %v451, 4
        %v455 = vmin.f32 %v451, %v454
        %v456 = vrot.slane %v455, 2
        %v457 = vmin.f32 %v455, %v456
        %v458 = vrot.slane %v457, 1
        %v459 = vmin.f32 %v457, %v458
        %vm460 = vcmp.eq.f32.partialorder %v451, %v459
        %v461 = vsel %vm460, %v453, 8
        %v462 = vrot.slane %v461, 4
        %vm463 = vcmp.lt.s32.totalorder %v461, %v462
        %v464 = vsel %vm463, %v461, %v462
        %v465 = vrot.slane %v464, 2
        %vm466 = vcmp.lt.s32.totalorder %v464, %v465
        %v467 = vsel %vm466, %v464, %v465
        %v468 = vrot.slane %v467, 1
        %vm469 = vcmp.lt.s32.totalorder %v467, %v468
        %v470 = vsel %vm469, %v467, %v468
        %vm471 = vcmp.eq.s32.totalorder %v453, %v470
        %v472 = vsel %vm471, inf, %v451
        %vm473 = vcmp.lt.f32.partialorder %v459, inf
        %v474 = vsel %vm473, %v459, inf
        %v475 = vsel %vm473, %v470, 0
        %v476 = vrot.slane %v472, 4
        %v477 = vmin.f32 %v472, %v476
        %v478 = vrot.slane %v477, 2
        %v479 = vmin.f32 %v477, %v478
        %v480 = vrot.slane %v479, 1
        %v481 = vmin.f32 %v479, %v480
        %vm482 = vcmp.eq.f32.partialorder %v472, %v481
        %v483 = vsel %vm482, %v453, 8
        %v484 = vrot.slane %v483, 4
        %vm485 = vcmp.lt.s32.totalorder %v483, %v484
        %v486 = vsel %vm485, %v483, %v484
        %v487 = vrot.slane %v486, 2
        %vm488 = vcmp.lt.s32.totalorder %v486, %v487
        %v489 = vsel %vm488, %v486, %v487
        %v490 = vrot.slane %v489, 1
        %vm491 = vcmp.lt.s32.totalorder %v489, %v490
        %v492 = vsel %vm491, %v489, %v490
        %vm493 = vcmp.eq.s32.totalorder %v453, %v492
        %v494 = vsel %vm493, inf, %v472
        %vm495 = vcmp.lt.f32.partialorder %v481, %v474
        %vm496 = vcmp.lt.f32.partialorder %v481, inf
        %v497 = vsel %vm495, %v481, %v474
        %v498 = vsel %vm495, %v492, %v475
        %v499 = vsel %vm496, %v481, inf
        %v500 = vsel %vm495, %v474, %v499
        %v501 = vsel %vm496, %v492, 0
        %v502 = vsel %vm495, %v475, %v501
        %v503 = vrot.slane %v494, 4
        %v504 = vmin.f32 %v494, %v503
        %v505 = vrot.slane %v504, 2
        %v506 = vmin.f32 %v504, %v505
        %v507 = vrot.slane %v506, 1
        %v508 = vmin.f32 %v506, %v507
        %vm509 = vcmp.eq.f32.partialorder %v494, %v508
        %v510 = vsel %vm509, %v453, 8
        %v511 = vrot.slane %v510, 4
        %vm512 = vcmp.lt.s32.totalorder %v510, %v511
        %v513 = vsel %vm512, %v510, %v511
        %v514 = vrot.slane %v513, 2
        %vm515 = vcmp.lt.s32.totalorder %v513, %v514
        %v516 = vsel %vm515, %v513, %v514
        %v517 = vrot.slane %v516, 1
        %vm518 = vcmp.lt.s32.totalorder %v516, %v517
        %v519 = vsel %vm518, %v516, %v517
        %vm520 = vcmp.lt.f32.partialorder %v508, %v497
        %vm521 = vcmp.lt.f32.partialorder %v508, %v500
        %vm522 = vcmp.lt.f32.partialorder %v508, inf
        %v523 = vsel %vm520, %v508, %v497
        %v524 = vsel %vm520, %v519, %v498
        %v525 = vsel %vm521, %v508, %v500
        %v526 = vsel %vm520, %v497, %v525
        %v527 = vsel %vm521, %v519, %v502
        %v528 = vsel %vm520, %v498, %v527
        %v529 = vsel %vm522, %v508, inf
        %v530 = vsel %vm521, %v500, %v529
        %v531 = vsel %vm522, %v519, 0
        %v532 = vsel %vm521, %v502, %v531
        %v533 = vadd.f32 %v523, 1e-08
        %v534 = vrcp.pop %v533
        %v535 = vadd.f32 %v526, 1e-08
        %v536 = vrcp.pop %v535
        %v537 = vadd.f32 %v530, 1e-08
        %v538 = vrcp.pop %v537
        %v539 = vadd.f32 %v534, %v536
        %v540 = vadd.f32 %v539, %v538
        %v541 = vrcp.pop %v540
        %v542 = vmul.f32 %v534, %v541
        %v543 = vmul.f32 %v536, %v541
        %v544 = vmul.f32 %v538, %v541
        %vm545 = vcmp.eq.s32.totalorder %v453, %v524
        %v546 = vsel %vm545, %v542, 0.0
        %v547 = vadd.f32 %v546, 0.0
        %vm548 = vcmp.eq.s32.totalorder %v453, %v528
        %v549 = vsel %vm548, %v543, 0.0
        %v550 = vadd.f32 %v547, %v549
        %vm551 = vcmp.eq.s32.totalorder %v453, %v532
        %v552 = vsel %vm551, %v544, 0.0
        %v553 = vadd.f32 %v550, %v552
        %v554 = vld [vmem:[%s407] sm:$0x7]
        %v555 = vpack.c.bf16 %v553, %v553
        %vm556 = vcmask 64512
        %v558 = vsel %vm556, %v554, 0
        %vm560 = vcmask 1043456
        %v562 = vsel %vm560, %v555, 0
        %564 = vmatprep.subr.bf16.mxu0 0
        %565 = vmatpush1.bf16.msra.mxu0 %v562
        %566 = vmatprep.subr.bf16.mxu0 0
        %567 = vmatpush1.bf16.msra.mxu0 0
        %568 = vmatprep.subr.bf16.mxu0 0
        %569 = vmatpush1.bf16.msra.mxu0 0
        %570 = vmatprep.subr.bf16.mxu0 0
        %571 = vmatpush1.bf16.msra.mxu0 0
        %572 = vmatprep.subr.bf16.mxu0 0
        %573 = vmatpush1.bf16.msra.mxu0 0
        %574 = vmatprep.subr.bf16.mxu0 0
        %575 = vmatpush1.bf16.msra.mxu0 0
        %576 = vmatprep.subr.bf16.mxu0 0
        %577 = vmatpush1.bf16.msra.mxu0 0
        %578 = vmatprep.subr.bf16.mxu0 0
        %579 = vmatpush1.bf16.msra.mxu0 0
        %580 = vmatprep.subr.bf16.mxu0 0
        %581 = vmatpush1.bf16.msra.mxu0 0
        %582 = vmatprep.subr.bf16.mxu0 0
        %583 = vmatpush1.bf16.msra.mxu0 0
        %584 = vmatprep.subr.bf16.mxu0 0
        %585 = vmatpush1.bf16.msra.mxu0 0
        %586 = vmatprep.subr.bf16.mxu0 0
        %587 = vmatpush1.bf16.msra.mxu0 0
        %588 = vmatprep.subr.bf16.mxu0 0
        %589 = vmatpush1.bf16.msra.mxu0 0
        %590 = vmatprep.subr.bf16.mxu0 0
        %591 = vmatpush1.bf16.msra.mxu0 0
        %592 = vmatprep.subr.bf16.mxu0 0
        %593 = vmatpush1.bf16.msra.mxu0 0
        %594 = vmatprep.subr.bf16.mxu0 0
        %595 = vmatpush1.bf16.msra.mxu0 0
        %596 = vmatprep.mubr.bf16.mxu0 0
        %597 = vmatmul.mubr.bf16.gmra.mrb[0].mxu0 %v558
        %v598 = vpop.f32.mrb[0].mxu0
        %v599 = vadd.f32 0.0, %v598
        %v600 = vpop.f32.mrb[0].mxu0
        %v601 = vpop.f32.mrb[0].mxu0
        %v602 = vpop.f32.mrb[0].mxu0
        %603 = vdwg.mxu0
        %v604 = vld [vmem:[%s414] sm:$0x3]
        %v605 = vld [vmem:[%s4] sm:$0xf]
        %v606 = vld [vmem:[%s4 + $0x4] sm:$0xf]
        %v607 = vld [vmem:[%s4 + $0x8] sm:$0xf]
        %v608 = vld [vmem:[%s4 + $0xc] sm:$0xf]
        %v609 = vld [vmem:[%s5] sm:$0xf]
        %v610 = vld [vmem:[%s5 + $0x4] sm:$0xf]
        %v611 = vld [vmem:[%s5 + $0x8] sm:$0xf]
        %v612 = vld [vmem:[%s5 + $0xc] sm:$0xf]
        %v613 = vpack.c.bf16 %v599, %v599
        %v618 = vunpack.c.l.b16 %v609
        %v619 = vunpack.c.l.b16 %v610
        %v620 = vunpack.c.l.b16 %v611
        %v621 = vunpack.c.l.b16 %v612
        %v622 = vpack.c.b16 %v619, %v618
        %v623 = vpack.c.b16 %v621, %v620
        %vm624 = vcmask 48128
        %v626 = vsel %vm624, %v622, 0
        %v629 = vsel %vm624, %v623, 0
        %vm631 = vcmask 1042432
        %v633 = vsel %vm631, %v613, 0
        %635 = vmatprep.subr.bf16.mxu0 0
        %636 = vmatpush1.bf16.msra.mxu0 %v633
        %637 = vmatprep.subr.bf16.mxu0 0
        %638 = vmatpush1.bf16.msra.mxu0 0
        %639 = vmatprep.subr.bf16.mxu0 0
        %640 = vmatpush1.bf16.msra.mxu0 0
        %641 = vmatprep.subr.bf16.mxu0 0
        %642 = vmatpush1.bf16.msra.mxu0 0
        %643 = vmatprep.subr.bf16.mxu0 0
        %644 = vmatpush1.bf16.msra.mxu0 0
        %645 = vmatprep.subr.bf16.mxu0 0
        %646 = vmatpush1.bf16.msra.mxu0 0
        %647 = vmatprep.subr.bf16.mxu0 0
        %648 = vmatpush1.bf16.msra.mxu0 0
        %649 = vmatprep.subr.bf16.mxu0 0
        %650 = vmatpush1.bf16.msra.mxu0 0
        %651 = vmatprep.subr.bf16.mxu0 0
        %652 = vmatpush1.bf16.msra.mxu0 0
        %653 = vmatprep.subr.bf16.mxu0 0
        %654 = vmatpush1.bf16.msra.mxu0 0
        %655 = vmatprep.subr.bf16.mxu0 0
        %656 = vmatpush1.bf16.msra.mxu0 0
        %657 = vmatprep.subr.bf16.mxu0 0
        %658 = vmatpush1.bf16.msra.mxu0 0
        %659 = vmatprep.subr.bf16.mxu0 0
        %660 = vmatpush1.bf16.msra.mxu0 0
        %661 = vmatprep.subr.bf16.mxu0 0
        %662 = vmatpush1.bf16.msra.mxu0 0
        %663 = vmatprep.subr.bf16.mxu0 0
        %664 = vmatpush1.bf16.msra.mxu0 0
        %665 = vmatprep.subr.bf16.mxu0 0
        %666 = vmatpush1.bf16.msra.mxu0 0
        %667 = vmatprep.mubr.bf16.mxu0 0
        %668 = vmatmul.mubr.bf16.gmra.mrb[0].mxu0 %v626
        %v669 = vpop.f32.mrb[0].mxu0
        %v670 = vadd.f32 0.0, %v669
        %v671 = vpop.f32.mrb[0].mxu0
        %v672 = vpop.f32.mrb[0].mxu0
        %v673 = vadd.f32 0.0, %v672
        %v674 = vpop.f32.mrb[0].mxu0
        %675 = vmatprep.mubr.bf16.mxu0 0
        %676 = vmatmul.mubr.bf16.gmra.mrb[0].mxu0 %v629
        %v677 = vpop.f32.mrb[0].mxu0
        %v678 = vadd.f32 0.0, %v677
        %v679 = vpop.f32.mrb[0].mxu0
        %v680 = vpop.f32.mrb[0].mxu0
        %v681 = vadd.f32 0.0, %v680
        %v682 = vpop.f32.mrb[0].mxu0
        %683 = vdwg.mxu0
        %v688 = vunpack.c.l.b16 %v605
        %v689 = vunpack.c.l.b16 %v606
        %v690 = vunpack.c.l.b16 %v607
        %v691 = vunpack.c.l.b16 %v608
        %v692 = vpack.c.b16 %v689, %v688
        %v693 = vpack.c.b16 %v691, %v690
        %vm694 = vcmask 31744
        %v696 = vsel %vm694, %v692, 0
        %v699 = vsel %vm694, %v693, 0
        %vm701 = vcmask 1041408
        %v703 = vsel %vm701, %v604, 0
        %705 = vmatprep.subr.bf16.mxu0 0
        %706 = vmatpush1.bf16.msra.mxu0 %v703
        %707 = vmatprep.subr.bf16.mxu0 0
        %708 = vmatpush1.bf16.msra.mxu0 0
        %709 = vmatprep.subr.bf16.mxu0 0
        %710 = vmatpush1.bf16.msra.mxu0 0
        %711 = vmatprep.subr.bf16.mxu0 0
        %712 = vmatpush1.bf16.msra.mxu0 0
        %713 = vmatprep.subr.bf16.mxu0 0
        %714 = vmatpush1.bf16.msra.mxu0 0
        %715 = vmatprep.subr.bf16.mxu0 0
        %716 = vmatpush1.bf16.msra.mxu0 0
        %717 = vmatprep.subr.bf16.mxu0 0
        %718 = vmatpush1.bf16.msra.mxu0 0
        %719 = vmatprep.subr.bf16.mxu0 0
        %720 = vmatpush1.bf16.msra.mxu0 0
        %721 = vmatprep.subr.bf16.mxu0 0
        %722 = vmatpush1.bf16.msra.mxu0 0
        %723 = vmatprep.subr.bf16.mxu0 0
        %724 = vmatpush1.bf16.msra.mxu0 0
        %725 = vmatprep.subr.bf16.mxu0 0
        %726 = vmatpush1.bf16.msra.mxu0 0
        %727 = vmatprep.subr.bf16.mxu0 0
        %728 = vmatpush1.bf16.msra.mxu0 0
        %729 = vmatprep.subr.bf16.mxu0 0
        %730 = vmatpush1.bf16.msra.mxu0 0
        %731 = vmatprep.subr.bf16.mxu0 0
        %732 = vmatpush1.bf16.msra.mxu0 0
        %733 = vmatprep.subr.bf16.mxu0 0
        %734 = vmatpush1.bf16.msra.mxu0 0
        %735 = vmatprep.subr.bf16.mxu0 0
        %736 = vmatpush1.bf16.msra.mxu0 0
        %737 = vmatprep.mubr.bf16.mxu0 0
        %738 = vmatmul.mubr.bf16.gmra.mrb[0].mxu0 %v696
        %v739 = vpop.f32.mrb[0].mxu0
        %v740 = vadd.f32 %v670, %v739
        %v741 = vpop.f32.mrb[0].mxu0
        %v742 = vpop.f32.mrb[0].mxu0
        %v743 = vadd.f32 %v673, %v742
        %v744 = vpop.f32.mrb[0].mxu0
        %745 = vmatprep.mubr.bf16.mxu0 0
        %746 = vmatmul.mubr.bf16.gmra.mrb[0].mxu0 %v699
        %v747 = vpop.f32.mrb[0].mxu0
        %v748 = vadd.f32 %v678, %v747
        %v749 = vpop.f32.mrb[0].mxu0
        %v750 = vpop.f32.mrb[0].mxu0
        %v751 = vadd.f32 %v681, %v750
        %v752 = vpop.f32.mrb[0].mxu0
        %753 = vdwg.mxu0
        %v754 = vld [vmem:[%s6] sm:$0xff]
        %v755 = vld [vmem:[%s6 + $0x8] sm:$0xff]
        %v756 = vld [vmem:[%s6 + $0x10] sm:$0xff]
        %v757 = vld [vmem:[%s6 + $0x18] sm:$0xff]
        %759 = vset.pattern.permute.xlu0 0
        %760 = vperm.xlu0 %759, %v754
        %v761 = vpop.permute.xlu0 %760
        %764 = vset.pattern.permute.xlu0 0
        %765 = vperm.xlu0 %764, %v755
        %v766 = vpop.permute.xlu0 %765
        %769 = vset.pattern.permute.xlu0 0
        %770 = vperm.xlu0 %769, %v756
        %v771 = vpop.permute.xlu0 %770
        %774 = vset.pattern.permute.xlu0 0
        %775 = vperm.xlu0 %774, %v757
        %v776 = vpop.permute.xlu0 %775
        %v778 = vadd.f32 %v740, %v761
        %v779 = vadd.f32 %v743, %v766
        %v780 = vadd.f32 %v748, %v771
        %v781 = vadd.f32 %v751, %v776
        %v782 = vmax.f32 %v778, 0.0
        %v783 = vmax.f32 %v779, 0.0
        %v784 = vmax.f32 %v780, 0.0
        %v785 = vmax.f32 %v781, 0.0
        %v786 = vld [vmem:[%s7] sm:$0xf]
        %v787 = vld [vmem:[%s7 + $0x4] sm:$0xf]
        %v788 = vpack.c.bf16 %v783, %v782
        %v789 = vpack.c.bf16 %v785, %v784
        %v790 = vld [vmem:[%s8] sm:$0xff]
        %v791 = vld [vmem:[%s8 + $0x8] sm:$0xff]
        %793 = vset.pattern.permute.xlu0 0
        %794 = vperm.xlu0 %793, %v790
        %v795 = vpop.permute.xlu0 %794
        %798 = vset.pattern.permute.xlu0 0
        %799 = vperm.xlu0 %798, %v791
        %v800 = vpop.permute.xlu0 %799
        %v804 = vunpack.c.l.b16 %v786
        %v805 = vunpack.c.l.b16 %v787
        %v806 = vpack.c.b16 %v805, %v804
        %vm807 = vcmask 261120
        %v809 = vsel %vm807, %v806, 0
        %811 = vmatprep.subr.bf16.mxu0 0
        %812 = vmatpush1.bf16.msra.mxu0 %v788
        %813 = vmatprep.subr.bf16.mxu0 0
        %814 = vmatpush1.bf16.msra.mxu0 %v789
        %815 = vmatprep.subr.bf16.mxu0 0
        %816 = vmatpush1.bf16.msra.mxu0 0
        %817 = vmatprep.subr.bf16.mxu0 0
        %818 = vmatpush1.bf16.msra.mxu0 0
        %819 = vmatprep.subr.bf16.mxu0 0
        %820 = vmatpush1.bf16.msra.mxu0 0
        %821 = vmatprep.subr.bf16.mxu0 0
        %822 = vmatpush1.bf16.msra.mxu0 0
        %823 = vmatprep.subr.bf16.mxu0 0
        %824 = vmatpush1.bf16.msra.mxu0 0
        %825 = vmatprep.subr.bf16.mxu0 0
        %826 = vmatpush1.bf16.msra.mxu0 0
        %827 = vmatprep.subr.bf16.mxu0 0
        %828 = vmatpush1.bf16.msra.mxu0 0
        %829 = vmatprep.subr.bf16.mxu0 0
        %830 = vmatpush1.bf16.msra.mxu0 0
        %831 = vmatprep.subr.bf16.mxu0 0
        %832 = vmatpush1.bf16.msra.mxu0 0
        %833 = vmatprep.subr.bf16.mxu0 0
        %834 = vmatpush1.bf16.msra.mxu0 0
        %835 = vmatprep.subr.bf16.mxu0 0
        %836 = vmatpush1.bf16.msra.mxu0 0
        %837 = vmatprep.subr.bf16.mxu0 0
        %838 = vmatpush1.bf16.msra.mxu0 0
        %839 = vmatprep.subr.bf16.mxu0 0
        %840 = vmatpush1.bf16.msra.mxu0 0
        %841 = vmatprep.subr.bf16.mxu0 0
        %842 = vmatpush1.bf16.msra.mxu0 0
        %843 = vmatprep.mubr.bf16.mxu0 0
        %844 = vmatmul.mubr.bf16.gmra.mrb[0].mxu0 %v809
        %v845 = vpop.f32.mrb[0].mxu0
        %v846 = vadd.f32 %v795, %v845
        %v847 = vpop.f32.mrb[0].mxu0
        %v848 = vpop.f32.mrb[0].mxu0
        %v849 = vadd.f32 %v800, %v848
        %v850 = vpop.f32.mrb[0].mxu0
        %851 = vdwg.mxu0
        %v852 = vmax.f32 %v846, 0.0
        %v853 = vmax.f32 %v849, 0.0
        %854 = vst [vmem:[%s392] sm:$0xff] %v852
        %855 = vst [vmem:[%s392 + $0x8] sm:$0xff] %v853
        %s856 = sand.u32 %s258, 1
        %s857 = scalar_lea.sflag [#allocation3], %s856
        %s858 = sand.u32 %s258, 1
        %s859 = smul.addr %s858, 16
        %s860 = scalar_lea.vmem [#allocation2], %s859
        // Predicated region
        $region57: #{tpu_custom_call.1} parent=55 // pred_check
          %p861 = pneg %p268
        $region58: #{tpu_custom_call.1} parent=55 // pred_check_branch
          %863 = sbr.rel (%p861) target = $region60
        $region59: #{tpu_custom_call.1} parent=55 // pred_region
          %s865 = ssub.s32 256, 256
          %866 = vsyncadd %s857, %s865
          %s867 = smul.addr %s27, 2
          %s868 = sadd.s32 %s28, %s867
          %s869 = smul.addr %s868, 128
          %s870 = scalar_lea.hbm %s9, %s869
          %s871 = sshll.u32 %s860, 4
          %s872 = int_to_ptr.vmem [resolvable:$true] %s871
          %877 = dma.vmem_to_hbm [thread:$0]  %s872, 256, %s870, %s857, 128, 128, 8
        $region60: #{tpu_custom_call.1} parent=55 // pred_fallthru
          _
      $region56: #{tpu_custom_call.1} parent=5 // pred_fallthru
        _
      %p878 = scmp.le.s32.totalorder 2, %s18
      // Predicated region
      $region61: #{tpu_custom_call.1} parent=5 // pred_check
        %p879 = pneg %p878
      $region62: #{tpu_custom_call.1} parent=5 // pred_check_branch
        %881 = sbr.rel (%p879) target = $region64
      $region63: #{tpu_custom_call.1} parent=5 // pred_region
        %s882 = ssub.s32 %s18, 2
        // Predicated region
        $region65: #{tpu_custom_call.1} parent=63 // pred_check
          %p883 = pneg %p274
        $region66: #{tpu_custom_call.1} parent=63 // pred_check_branch
          %885 = sbr.rel (%p883) target = $region68
        $region67: #{tpu_custom_call.1} parent=63 // pred_region
          %s886 = sand.u32 %s259, 1
          %s887 = scalar_lea.sflag [#allocation3], %s886
          %s888 = sand.u32 %s259, 1
          %s889 = smul.addr %s888, 16
          %s890 = scalar_lea.vmem [#allocation2], %s889
          %891 = dma.done %s887, 256
        $region68: #{tpu_custom_call.1} parent=63 // pred_fallthru
          _
      $region64: #{tpu_custom_call.1} parent=5 // pred_fallthru
        _
    $region6: #{tpu_custom_call.1} parent=1 // loop_footer
      %s22 = sadd.s32 1, %s18
    $region7: #{tpu_custom_call.1} parent=1 // loop_footer_branch
      %17 = sbr.rel target = $region3
    $region8: #{tpu_custom_call.1} parent=1 // loop_exit
      _
    %892 = vsyncpa [#allocation3], 1
    %s893 = scalar_lea.sflag [#allocation3], 1
    %894 = vsyncpa %s893, 1

</llo_original>
